<compile_context>
chip_gen: v7x
topology: tpu7x:2x2x1
jax: 0.10.0
libtpu: 0.0.40
codegen_flags: <defaults>
</compile_context>

<pallas_src>
import functools
import math

import jax
import jax.numpy as jnp
from jax.experimental import pallas as pl
from jax.experimental.pallas import tpu as pltpu

GAMMA = 2.0       # module default -> explicit square in the kernel
ALPHA = 0.4
SMOOTHING = 0.0   # module default -> the smoothing line is an identity

_LANES = 512            # lane-dense column width (multiple of 128)
_SUBLANES = 8
_MAX_BLOCK_ROWS = 2048  # 2048 x 512 x 4 B = 4 MiB per f32 input block


def _cdiv(a, b):
    return -(-a // b)


@functools.lru_cache(maxsize=None)
def _multi_tensorcore():
    """Best-effort detection of multi-TensorCore chips (v7x-class)."""
    try:
        dev = jax.devices()[0]
        kind = str(getattr(dev, "device_kind", "")).lower()
        if "v7" in kind:
            return True
        cores = getattr(dev, "num_cores", None)
        return bool(cores) and int(cores) > 1
    except Exception:
        return False


def _focal_elementwise(x, t):
    """Exact per-element focal loss (same math as the kernel's default path)."""
    x = x.astype(jnp.float32)
    t = t.astype(jnp.float32)
    t = t * (1.0 - SMOOTHING) + 0.5 * SMOOTHING
    e = jnp.exp(-jnp.abs(x))
    bce = jnp.maximum(x, 0.0) - x * t + jnp.log1p(e)
    pt = jnp.exp(-bce)
    one_minus_pt = 1.0 - pt
    focal = one_minus_pt * one_minus_pt * bce
    return (t * ALPHA + (1.0 - t) * (1.0 - ALPHA)) * focal


def _focal_loss_kernel(x_ref, t_ref, out_ref, *, kernel_rows, block_rows,
                       blocks_per_part, ncols, binary_targets):
    p = pl.program_id(0)
    j = pl.program_id(1)

    @pl.when(j == 0)
    def _():
        out_ref[...] = jnp.zeros_like(out_ref)

    x = x_ref[...].astype(jnp.float32)
    t = t_ref[...].astype(jnp.float32)

    # Label smoothing (identity at the module default SMOOTHING == 0.0).
    t = t * (1.0 - SMOOTHING) + 0.5 * SMOOTHING

    # Numerically stable binary_cross_entropy_with_logits (reduction='none').
    e = jnp.exp(-jnp.abs(x))                                    # EUP 1
    bce = jnp.maximum(x, 0.0) - x * t + jnp.log1p(e)            # EUP 2

    if binary_targets:
        # exp(-bce) == exp(x*t - max(x,0)) / (1 + e); for hard {0,1} targets
        # the numerator is a select (1 or e) -> no third transcendental.
        num = jnp.where((t > 0.5) == (x >= 0.0), 1.0, e)
        pt = num * pl.reciprocal(1.0 + e, approx=True)
    else:
        pt = jnp.exp(-bce)                                      # EUP 3

    # (1 - pt) ** GAMMA with GAMMA == 2.0: explicit square (no pow, no NaN if
    # pt rounds marginally above 1).
    one_minus_pt = 1.0 - pt
    focal = one_minus_pt * one_minus_pt * bce
    focal = (t * ALPHA + (1.0 - t) * (1.0 - ALPHA)) * focal

    def _accum(vals):
        # Fold to a vreg-shaped (8, ncols) partial: VPU adds only in the loop;
        # the single cross-lane reduce-to-scalar happens once in the wrapper.
        out_ref[...] += vals.reshape(block_rows // _SUBLANES, _SUBLANES,
                                     ncols).sum(axis=0)

    base_row = (p * blocks_per_part + j) * block_rows
    is_full = base_row + block_rows <= kernel_rows

    @pl.when(is_full)
    def _():                      # fast path: no mask for full blocks
        _accum(focal)

    @pl.when(jnp.logical_not(is_full))
    def _():                      # only the final partial edge block pays for the mask
        rid = jax.lax.broadcasted_iota(jnp.int32, (block_rows, ncols), 0)
        # Row-level compare (no *ncols multiply) -> no int32 overflow risk.
        _accum(jnp.where(base_row + rid < kernel_rows, focal, 0.0))


def focal_loss(inputs, targets, *, binary_targets=False,
               max_block_rows=_MAX_BLOCK_ROWS):
    """Scalar mean focal loss (float32). Accepts any (matching) shape/dtype."""
    assert inputs.shape == targets.shape
    if targets.dtype == jnp.bool_:
        targets = targets.astype(jnp.float32)
    binary_targets = bool(binary_targets) and SMOOTHING == 0.0

    total = math.prod(inputs.shape) if inputs.shape else 1
    flat_x = inputs.reshape(-1)
    flat_t = targets.reshape(-1)

    rows_total = total // _LANES
    kernel_rows = (rows_total // _SUBLANES) * _SUBLANES   # multiple of 8
    main = kernel_rows * _LANES

    # Tiny ragged remainder (< 4096 elements): plain JAX, no padding copy.
    tail_sum = jnp.float32(0.0)
    if main < total:
        tail_sum = _focal_elementwise(flat_x[main:], flat_t[main:]).sum()

    if kernel_rows == 0:
        # Whole problem is smaller than one lane-dense slab block.
        return (tail_sum / jnp.float32(total)).astype(jnp.float32)

    # Reshape of a contiguous prefix: no full-array pad / copy of the bulk data.
    x2 = flat_x[:main].reshape(kernel_rows, _LANES)
    t2 = flat_t[:main].reshape(kernel_rows, _LANES)

    block_rows = max(_SUBLANES,
                     (min(max_block_rows, kernel_rows) // _SUBLANES) * _SUBLANES)
    nblocks = _cdiv(kernel_rows, block_rows)

    # 2-way megacore split only when the hardware has 2 TensorCores and the
    # block count splits evenly (avoids fully out-of-range blocks and avoids
    # shrinking blocks on 1-TC chips).
    num_parts = 2 if (_multi_tensorcore() and nblocks >= 2 and nblocks % 2 == 0) else 1
    bpp = nblocks // num_parts

    kernel = functools.partial(
        _focal_loss_kernel,
        kernel_rows=kernel_rows,
        block_rows=block_rows,
        blocks_per_part=bpp,
        ncols=_LANES,
        binary_targets=binary_targets,
    )

    partials = pl.pallas_call(
        kernel,
        out_shape=jax.ShapeDtypeStruct((num_parts * _SUBLANES, _LANES),
                                       jnp.float32),
        grid=(num_parts, bpp),
        in_specs=[
            # NOTE: if profiling shows exposed DMA, sweep
            # pipeline_mode=pl.Buffered(3) here (watch the v7x 64 MiB VMEM cap).
            pl.BlockSpec((block_rows, _LANES), lambda p, j: (p * bpp + j, 0)),
            pl.BlockSpec((block_rows, _LANES), lambda p, j: (p * bpp + j, 0)),
        ],
        # Same output block for every inner step of a partition -> resident
        # per-partition (8, 512) accumulator.
        out_specs=pl.BlockSpec((_SUBLANES, _LANES), lambda p, j: (p, 0)),
        compiler_params=pltpu.CompilerParams(
            dimension_semantics=("parallel", "arbitrary"),
            # 2 inputs x 2 buffers x 4 MiB (f32) = 16 MiB + small output:
            # comfortably under 32 MiB on v5e/v6e/v7x.
            vmem_limit_bytes=32 * 1024 * 1024,
        ),
    )(x2, t2)

    # reduction == 'mean' (module default): one tiny final reduce in JAX.
    return ((partials.sum() + tail_sum) / jnp.float32(total)).astype(jnp.float32)


def focal_loss_ref(inputs, targets):
    x = inputs.astype(jnp.float32)
    t = targets.astype(jnp.float32)
    t = t * (1.0 - SMOOTHING) + 0.5 * SMOOTHING
    bce = jnp.maximum(x, 0.0) - x * t + jnp.log1p(jnp.exp(-jnp.abs(x)))
    pt = jnp.exp(-bce)
    focal = (1.0 - pt) ** GAMMA * bce
    alpha_factor = t * ALPHA + (1.0 - t) * (1.0 - ALPHA)
    return jnp.mean(alpha_factor * focal)


if __name__ == "__main__":
    key = jax.random.PRNGKey(0)
    ks = jax.random.split(key, 8)

    # Case 1: 16 x 256 = 4096 elements (divisible by 512) -> kernel fast path,
    # no padding, no tail.
    B, N = 16, 256
    x1 = jax.random.normal(ks[0], (B, N), dtype=jnp.float32) * 2.0
    t1 = jax.random.bernoulli(ks[1], p=0.3, shape=(B, N)).astype(jnp.float32)
    out1 = jax.block_until_ready(focal_loss(x1, t1))
    ref1 = focal_loss_ref(x1, t1)
    assert jnp.allclose(out1, ref1, rtol=1e-5, atol=1e-6), (out1, ref1)

    # Case 2: bf16 inputs, ragged size (26 x 512 = 13312) with a small block
    # override -> exercises the partial-edge-block mask path and the JAX tail.
    B2, N2 = 26, 512
    x2 = (jax.random.normal(ks[2], (B2, N2), dtype=jnp.float32) * 2.0).astype(jnp.bfloat16)
    t2 = jax.random.bernoulli(ks[3], p=0.3, shape=(B2, N2)).astype(jnp.bfloat16)
    out2 = jax.block_until_ready(focal_loss(x2, t2, max_block_rows=16))
    ref2 = focal_loss_ref(x2, t2)
    assert jnp.allclose(out2, ref2, rtol=1e-4, atol=1e-6), (out2, ref2)

    # Case 3: tiny ragged input (< 4096 elements) -> pure-JAX fallback path.
    B3, N3 = 7, 300
    x3 = jax.random.normal(ks[4], (B3, N3), dtype=jnp.float32) * 2.0
    t3 = jax.random.bernoulli(ks[5], p=0.3, shape=(B3, N3)).astype(jnp.float32)
    out3 = jax.block_until_ready(focal_loss(x3, t3))
    ref3 = focal_loss_ref(x3, t3)
    assert jnp.allclose(out3, ref3, rtol=1e-5, atol=1e-6), (out3, ref3)

    # Case 4: binary-target fast path (one fewer transcendental per element);
    # approx reciprocal -> compare with a looser tolerance.
    out4 = jax.block_until_ready(focal_loss(x1, t1, binary_targets=True))
    assert jnp.allclose(out4, ref1, rtol=2e-2, atol=1e-4), (out4, ref1)

    print("KERNEL_OK")
</pallas_src>

<mosaic_0001>
module attributes {stable_mosaic.version = 11 : i64} {
  func.func @_focal_loss_kernel(%arg0: i32, %arg1: i32, %arg2: memref<8x512xf32, #tpu.memory_space<vmem>>, %arg3: memref<8x512xf32, #tpu.memory_space<vmem>>, %arg4: memref<8x512xf32, #tpu.memory_space<vmem>>) attributes {dimension_semantics = [#tpu.dimension_semantics<parallel>, #tpu.dimension_semantics<arbitrary>], iteration_bounds = array<i64: 1, 1>, scalar_prefetch = 0 : i64, scratch_operands = 0 : i64, tpu.core_type = #tpu.core_type<tc>, window_params = [{transform_indices = @transform_0, window_bounds = array<i64: 8, 512>}, {transform_indices = @transform_1, window_bounds = array<i64: 8, 512>}, {transform_indices = @transform_2, window_bounds = array<i64: 8, 512>}]} {
    %c0_i32 = arith.constant 0 : i32
    %0 = arith.cmpi eq, %arg1, %c0_i32 : i32
    %1 = arith.extui %0 : i1 to i32
    %c0_i32_0 = arith.constant 0 : i32
    %2 = arith.cmpi ne, %1, %c0_i32_0 : i32
    scf.if %2 {
      %cst_16 = arith.constant 0.000000e+00 : f32
      %44 = vector.broadcast %cst_16 : f32 to vector<8x512xf32>
      %c0_17 = arith.constant 0 : index
      %c0_18 = arith.constant 0 : index
      %45 = vector.load %arg4[%c0_17, %c0_18] : memref<8x512xf32, #tpu.memory_space<vmem>>, vector<8x512xf32>
      tpu.vector_store %arg4[%c0_17, %c0_18], %44 {strides = array<i32>} : memref<8x512xf32, #tpu.memory_space<vmem>>, vector<8x512xf32>,
    } else {
    }
    %c0 = arith.constant 0 : index
    %c0_1 = arith.constant 0 : index
    %3 = vector.load %arg2[%c0, %c0_1] : memref<8x512xf32, #tpu.memory_space<vmem>>, vector<8x512xf32>
    %c0_2 = arith.constant 0 : index
    %c0_3 = arith.constant 0 : index
    %4 = vector.load %arg3[%c0_2, %c0_3] : memref<8x512xf32, #tpu.memory_space<vmem>>, vector<8x512xf32>
    %cst = arith.constant 1.000000e+00 : f32
    %5 = vector.broadcast %cst : f32 to vector<8x512xf32>
    %6 = arith.mulf %4, %5 : vector<8x512xf32>
    %cst_4 = arith.constant 0.000000e+00 : f32
    %7 = vector.broadcast %cst_4 : f32 to vector<8x512xf32>
    %8 = arith.addf %6, %7 : vector<8x512xf32>
    %9 = math.absf %3 : vector<8x512xf32>
    %cst_5 = arith.constant 0.000000e+00 : f32
    %10 = vector.broadcast %cst_5 : f32 to vector<8x512xf32>
    %11 = arith.subf %10, %9 : vector<8x512xf32>
    %12 = math.exp %11 : vector<8x512xf32>
    %cst_6 = arith.constant 0.000000e+00 : f32
    %13 = vector.broadcast %cst_6 : f32 to vector<8x512xf32>
    %14 = arith.maximumf %3, %13 : vector<8x512xf32>
    %15 = arith.mulf %3, %8 : vector<8x512xf32>
    %16 = arith.subf %14, %15 : vector<8x512xf32>
    %17 = math.log1p %12 : vector<8x512xf32>
    %18 = arith.addf %16, %17 : vector<8x512xf32>
    %cst_7 = arith.constant 0.000000e+00 : f32
    %19 = vector.broadcast %cst_7 : f32 to vector<8x512xf32>
    %20 = arith.subf %19, %18 : vector<8x512xf32>
    %21 = math.exp %20 : vector<8x512xf32>
    %cst_8 = arith.constant 1.000000e+00 : f32
    %22 = vector.broadcast %cst_8 : f32 to vector<8x512xf32>
    %23 = arith.subf %22, %21 : vector<8x512xf32>
    %24 = arith.mulf %23, %23 : vector<8x512xf32>
    %25 = arith.mulf %24, %18 : vector<8x512xf32>
    %cst_9 = arith.constant 4.000000e-01 : f32
    %26 = vector.broadcast %cst_9 : f32 to vector<8x512xf32>
    %27 = arith.mulf %8, %26 : vector<8x512xf32>
    %cst_10 = arith.constant 1.000000e+00 : f32
    %28 = vector.broadcast %cst_10 : f32 to vector<8x512xf32>
    %29 = arith.subf %28, %8 : vector<8x512xf32>
    %cst_11 = arith.constant 6.000000e-01 : f32
    %30 = vector.broadcast %cst_11 : f32 to vector<8x512xf32>
    %31 = arith.mulf %29, %30 : vector<8x512xf32>
    %32 = arith.addf %27, %31 : vector<8x512xf32>
    %33 = arith.mulf %32, %25 : vector<8x512xf32>
    %c1_i32 = arith.constant 1 : i32
    %34 = arith.muli %arg0, %c1_i32 : i32
    %35 = arith.addi %34, %arg1 : i32
    %c8_i32 = arith.constant 8 : i32
    %36 = arith.muli %35, %c8_i32 : i32
    %c8_i32_12 = arith.constant 8 : i32
    %37 = arith.addi %36, %c8_i32_12 : i32
    %c8_i32_13 = arith.constant 8 : i32
    %38 = arith.cmpi sle, %37, %c8_i32_13 : i32
    %39 = arith.extui %38 : i1 to i32
    %c0_i32_14 = arith.constant 0 : i32
    %40 = arith.cmpi ne, %39, %c0_i32_14 : i32
    scf.if %40 {
      %c0_16 = arith.constant 0 : index
      %c0_17 = arith.constant 0 : index
      %44 = vector.load %arg4[%c0_16, %c0_17] : memref<8x512xf32, #tpu.memory_space<vmem>>, vector<8x512xf32>
      %45 = vector.shape_cast %33 : vector<8x512xf32> to vector<1x8x512xf32>
      %cst_18 = arith.constant dense<0.000000e+00> : vector<8x512xf32>
      %46 = vector.multi_reduction <add>, %45, %cst_18 [0] : vector<1x8x512xf32> to vector<8x512xf32>
      %47 = arith.addf %44, %46 : vector<8x512xf32>
      %c0_19 = arith.constant 0 : index
      %c0_20 = arith.constant 0 : index
      %48 = vector.load %arg4[%c0_19, %c0_20] : memref<8x512xf32, #tpu.memory_space<vmem>>, vector<8x512xf32>
      tpu.vector_store %arg4[%c0_19, %c0_20], %47 {strides = array<i32>} : memref<8x512xf32, #tpu.memory_space<vmem>>, vector<8x512xf32>,
    } else {
    }
    %true = arith.constant true
    %41 = arith.xori %38, %true : i1
    %42 = arith.extui %41 : i1 to i32
    %c0_i32_15 = arith.constant 0 : i32
    %43 = arith.cmpi ne, %42, %c0_i32_15 : i32
    scf.if %43 {
      %44 = tpu.iota {dimensions = array<i32: 0>} : vector<8x512xi32>
      %45 = vector.broadcast %36 : i32 to vector<8x512xi32>
      %46 = arith.addi %45, %44 : vector<8x512xi32>
      %c8_i32_16 = arith.constant 8 : i32
      %47 = vector.broadcast %c8_i32_16 : i32 to vector<8x512xi32>
      %48 = arith.cmpi slt, %46, %47 : vector<8x512xi32>
      %cst_17 = arith.constant 0.000000e+00 : f32
      %49 = vector.broadcast %cst_17 : f32 to vector<8x512xf32>
      %50 = arith.select %48, %33, %49 : vector<8x512xi1>, vector<8x512xf32>
      %c0_18 = arith.constant 0 : index
      %c0_19 = arith.constant 0 : index
      %51 = vector.load %arg4[%c0_18, %c0_19] : memref<8x512xf32, #tpu.memory_space<vmem>>, vector<8x512xf32>
      %52 = vector.shape_cast %50 : vector<8x512xf32> to vector<1x8x512xf32>
      %cst_20 = arith.constant dense<0.000000e+00> : vector<8x512xf32>
      %53 = vector.multi_reduction <add>, %52, %cst_20 [0] : vector<1x8x512xf32> to vector<8x512xf32>
      %54 = arith.addf %51, %53 : vector<8x512xf32>
      %c0_21 = arith.constant 0 : index
      %c0_22 = arith.constant 0 : index
      %55 = vector.load %arg4[%c0_21, %c0_22] : memref<8x512xf32, #tpu.memory_space<vmem>>, vector<8x512xf32>
      tpu.vector_store %arg4[%c0_21, %c0_22], %54 {strides = array<i32>} : memref<8x512xf32, #tpu.memory_space<vmem>>, vector<8x512xf32>,
    } else {
    }
    return
  }
  func.func @transform_0(%arg0: i32, %arg1: i32) -> (i32, i32) {
    %c1_i32 = arith.constant 1 : i32
    %0 = arith.muli %arg0, %c1_i32 : i32
    %1 = arith.addi %0, %arg1 : i32
    %c0_i32 = arith.constant 0 : i32
    %c0_i32_0 = arith.constant 0 : i32
    return %1, %c0_i32 : i32, i32
  }
  func.func @transform_1(%arg0: i32, %arg1: i32) -> (i32, i32) {
    %c1_i32 = arith.constant 1 : i32
    %0 = arith.muli %arg0, %c1_i32 : i32
    %1 = arith.addi %0, %arg1 : i32
    %c0_i32 = arith.constant 0 : i32
    %c0_i32_0 = arith.constant 0 : i32
    return %1, %c0_i32 : i32, i32
  }
  func.func @transform_2(%arg0: i32, %arg1: i32) -> (i32, i32) {
    %c0_i32 = arith.constant 0 : i32
    %c0_i32_0 = arith.constant 0 : i32
    return %arg0, %c0_i32 : i32, i32
  }
}

</mosaic_0001>

<llo_original>
// kernel: tpu_custom_call.1
$region0: #{tpu_custom_call.1}
  #allocation0 [shape = 'u32[]', space=smem, size = 0x4, offset = 0x4, fixed_abs, tag = 'smem constant byte address 0x4 - core index']
  #allocation1 [shape = 'u32[144,128]{1,0:T(1,128)}', space=vmem, size = 0x12000, scoped, tag = 'internal scratch']
  %s0 = inlined_call_operand.hbm [shape: f32[8,512], index: 0, kind: input, shape index: {}]
  %s1 = inlined_call_operand.hbm [shape: f32[8,512], index: 1, kind: input, shape index: {}]
  %s2 = inlined_call_operand.hbm [shape: f32[8,512], index: 2, kind: output, shape index: {}]
  %s3 = sld [smem:[#allocation0]]
  $region38: #{tpu_custom_call.1} parent=0
    _
  %s5 = ssub.s32 1, %s3
  %s6 = scalar_select 0, %s5, %s3
  $region1: #{tpu_custom_call.1} parent=0
    #allocation2 [shape = 'u8[16384]{0}', space=vmem, size = 0x4000, scoped, tag = 'input window, operand 0, single buffered']
    #allocation3 [shape = 's32[1]{0}', space=sflag, size = 0x4, scoped, tag = 'scoped memory for tpu_custom_call.1']
    #allocation4 [shape = 's32[1]{0}', space=sflag, size = 0x4, scoped, tag = 'scoped memory for tpu_custom_call.1']
    #allocation5 [shape = 'u8[16384]{0}', space=vmem, size = 0x4000, scoped, tag = 'input window, operand 1, single buffered']
    #allocation6 [shape = 's32[1]{0}', space=sflag, size = 0x4, scoped, tag = 'scoped memory for tpu_custom_call.1']
    #allocation7 [shape = 'u8[16384]{0}', space=vmem, size = 0x4000, scoped, tag = 'output window, operand 0, single buffered']
    %7 = vsyncpa [#allocation3], 0
    %8 = vsyncpa [#allocation6], 0
    %9 = vsyncpa [#allocation4], 0
    // Predicated region
    $region2: #{tpu_custom_call.1} parent=1 // pred_check
      _
    $region3: #{tpu_custom_call.1} parent=1 // pred_check_branch
      %11 = sbr.rel (0) target = $region5
    $region4: #{tpu_custom_call.1} parent=1 // pred_region
      %s12 = sadd.s32 0, 0
      %s14 = ssub.s32 512, 512
      %15 = vsyncadd [#allocation3], %s14
      %s16 = smul.addr %s12, 4
      %s17 = smul.addr %s16, 128
      %s18 = scalar_lea.hbm %s0, %s17
      %s20 = sshll.u32 [#allocation2], 4
      %s21 = int_to_ptr.vmem [resolvable:$true] %s20
      %23 = dma.hbm_to_vmem [thread:$0]  %s18, 512, %s21, [#allocation3]
    $region5: #{tpu_custom_call.1} parent=1 // pred_fallthru
      _
    // Predicated region
    $region6: #{tpu_custom_call.1} parent=1 // pred_check
      _
    $region7: #{tpu_custom_call.1} parent=1 // pred_check_branch
      %25 = sbr.rel (0) target = $region9
    $region8: #{tpu_custom_call.1} parent=1 // pred_region
      %s26 = sadd.s32 0, 0
      %s28 = ssub.s32 512, 512
      %29 = vsyncadd [#allocation6], %s28
      %s30 = smul.addr %s26, 4
      %s31 = smul.addr %s30, 128
      %s32 = scalar_lea.hbm %s1, %s31
      %s34 = sshll.u32 [#allocation5], 4
      %s35 = int_to_ptr.vmem [resolvable:$true] %s34
      %37 = dma.hbm_to_vmem [thread:$0]  %s32, 512, %s35, [#allocation6]
    $region9: #{tpu_custom_call.1} parent=1 // pred_fallthru
      _
    // Predicated region
    $region10: #{tpu_custom_call.1} parent=1 // pred_check
      _
    $region11: #{tpu_custom_call.1} parent=1 // pred_check_branch
      %39 = sbr.rel (0) target = $region13
    $region12: #{tpu_custom_call.1} parent=1 // pred_region
      %40 = dma.done [#allocation3], 512
    $region13: #{tpu_custom_call.1} parent=1 // pred_fallthru
      _
    // Predicated region
    $region14: #{tpu_custom_call.1} parent=1 // pred_check
      _
    $region15: #{tpu_custom_call.1} parent=1 // pred_check_branch
      %42 = sbr.rel (0) target = $region17
    $region16: #{tpu_custom_call.1} parent=1 // pred_region
      %43 = dma.done [#allocation6], 512
    $region17: #{tpu_custom_call.1} parent=1 // pred_fallthru
      _
    %s44 = sadd.s32 0, 0
    %s45 = sadd.s32 0, 0
    %p46 = scmp.eq.s32.totalorder 0, 0
    // Predicated region
    $region18: #{tpu_custom_call.1} parent=1 // pred_check
      %p47 = pneg %p46
    $region19: #{tpu_custom_call.1} parent=1 // pred_check_branch
      %49 = sbr.rel (%p47) target = $region21
    $region20: #{tpu_custom_call.1} parent=1 // pred_region
      %50 = vst [vmem:[#allocation7] sm:$0xff] 0.0
      %51 = vst [vmem:[#allocation7 + $0x8] sm:$0xff] 0.0
      %52 = vst [vmem:[#allocation7 + $0x10] sm:$0xff] 0.0
      %53 = vst [vmem:[#allocation7 + $0x18] sm:$0xff] 0.0
    $region21: #{tpu_custom_call.1} parent=1 // pred_fallthru
      _
    %v54 = vld [vmem:[#allocation2] sm:$0xff]
    %v55 = vld [vmem:[#allocation2 + $0x8] sm:$0xff]
    %v56 = vld [vmem:[#allocation2 + $0x10] sm:$0xff]
    %v57 = vld [vmem:[#allocation2 + $0x18] sm:$0xff]
    %v58 = vld [vmem:[#allocation5] sm:$0xff]
    %v59 = vld [vmem:[#allocation5 + $0x8] sm:$0xff]
    %v60 = vld [vmem:[#allocation5 + $0x10] sm:$0xff]
    %v61 = vld [vmem:[#allocation5 + $0x18] sm:$0xff]
    %v62 = vadd.f32 %v58, 0.0
    %v63 = vadd.f32 %v59, 0.0
    %v64 = vadd.f32 %v60, 0.0
    %v65 = vadd.f32 %v61, 0.0
    %v66 = vand.u32 2147483647, %v54
    %v67 = vand.u32 2147483647, %v55
    %v68 = vand.u32 2147483647, %v56
    %v69 = vand.u32 2147483647, %v57
    %v70 = vsub.f32 0.0, %v66
    %v71 = vsub.f32 0.0, %v67
    %v72 = vsub.f32 0.0, %v68
    %v73 = vsub.f32 0.0, %v69
    %v74 = vmul.f32 %v70, 1.442695
    %v75 = vpow.pop %v74
    %v76 = vmul.f32 %v71, 1.442695
    %v77 = vpow.pop %v76
    %v78 = vmul.f32 %v72, 1.442695
    %v79 = vpow.pop %v78
    %v80 = vmul.f32 %v73, 1.442695
    %v81 = vpow.pop %v80
    %v82 = vmax.f32 %v54, 0.0
    %v83 = vmax.f32 %v55, 0.0
    %v84 = vmax.f32 %v56, 0.0
    %v85 = vmax.f32 %v57, 0.0
    %v86 = vmul.f32 %v54, %v62
    %v87 = vmul.f32 %v55, %v63
    %v88 = vmul.f32 %v56, %v64
    %v89 = vmul.f32 %v57, %v65
    %v90 = vsub.f32 %v82, %v86
    %v91 = vsub.f32 %v83, %v87
    %v92 = vsub.f32 %v84, %v88
    %v93 = vsub.f32 %v85, %v89
    %v94 = vadd.f32 %v75, 1.0
    %v95 = vlog2.pop %v94
    %v96 = vmul.f32 %v95, 0.6931472
    %v97 = vmul.f32 -0.5, %v75
    %v98 = vadd.f32 %v97, 1.0
    %v99 = vmul.f32 %v98, %v75
    %v100 = vand.u32 2147483647, %v75
    %vm101 = vcmp.lt.f32.partialorder %v100, 0.0004427343
    %v102 = vsel %vm101, %v99, %v96
    %v103 = vadd.f32 %v77, 1.0
    %v104 = vlog2.pop %v103
    %v105 = vmul.f32 %v104, 0.6931472
    %v106 = vmul.f32 -0.5, %v77
    %v107 = vadd.f32 %v106, 1.0
    %v108 = vmul.f32 %v107, %v77
    %v109 = vand.u32 2147483647, %v77
    %vm110 = vcmp.lt.f32.partialorder %v109, 0.0004427343
    %v111 = vsel %vm110, %v108, %v105
    %v112 = vadd.f32 %v79, 1.0
    %v113 = vlog2.pop %v112
    %v114 = vmul.f32 %v113, 0.6931472
    %v115 = vmul.f32 -0.5, %v79
    %v116 = vadd.f32 %v115, 1.0
    %v117 = vmul.f32 %v116, %v79
    %v118 = vand.u32 2147483647, %v79
    %vm119 = vcmp.lt.f32.partialorder %v118, 0.0004427343
    %v120 = vsel %vm119, %v117, %v114
    %v121 = vadd.f32 %v81, 1.0
    %v122 = vlog2.pop %v121
    %v123 = vmul.f32 %v122, 0.6931472
    %v124 = vmul.f32 -0.5, %v81
    %v125 = vadd.f32 %v124, 1.0
    %v126 = vmul.f32 %v125, %v81
    %v127 = vand.u32 2147483647, %v81
    %vm128 = vcmp.lt.f32.partialorder %v127, 0.0004427343
    %v129 = vsel %vm128, %v126, %v123
    %v130 = vadd.f32 %v90, %v102
    %v131 = vadd.f32 %v91, %v111
    %v132 = vadd.f32 %v92, %v120
    %v133 = vadd.f32 %v93, %v129
    %v134 = vsub.f32 0.0, %v130
    %v135 = vsub.f32 0.0, %v131
    %v136 = vsub.f32 0.0, %v132
    %v137 = vsub.f32 0.0, %v133
    %v138 = vmul.f32 %v134, 1.442695
    %v139 = vpow.pop %v138
    %v140 = vmul.f32 %v135, 1.442695
    %v141 = vpow.pop %v140
    %v142 = vmul.f32 %v136, 1.442695
    %v143 = vpow.pop %v142
    %v144 = vmul.f32 %v137, 1.442695
    %v145 = vpow.pop %v144
    %v146 = vsub.f32 1.0, %v139
    %v147 = vsub.f32 1.0, %v141
    %v148 = vsub.f32 1.0, %v143
    %v149 = vsub.f32 1.0, %v145
    %v150 = vmul.f32 %v146, %v146
    %v151 = vmul.f32 %v147, %v147
    %v152 = vmul.f32 %v148, %v148
    %v153 = vmul.f32 %v149, %v149
    %v154 = vmul.f32 %v150, %v130
    %v155 = vmul.f32 %v151, %v131
    %v156 = vmul.f32 %v152, %v132
    %v157 = vmul.f32 %v153, %v133
    %v158 = vmul.f32 %v62, 0.4
    %v159 = vmul.f32 %v63, 0.4
    %v160 = vmul.f32 %v64, 0.4
    %v161 = vmul.f32 %v65, 0.4
    %v162 = vsub.f32 1.0, %v62
    %v163 = vsub.f32 1.0, %v63
    %v164 = vsub.f32 1.0, %v64
    %v165 = vsub.f32 1.0, %v65
    %v166 = vmul.f32 %v162, 0.6
    %v167 = vmul.f32 %v163, 0.6
    %v168 = vmul.f32 %v164, 0.6
    %v169 = vmul.f32 %v165, 0.6
    %v170 = vadd.f32 %v158, %v166
    %v171 = vadd.f32 %v159, %v167
    %v172 = vadd.f32 %v160, %v168
    %v173 = vadd.f32 %v161, %v169
    %v174 = vmul.f32 %v170, %v154
    %v175 = vmul.f32 %v171, %v155
    %v176 = vmul.f32 %v172, %v156
    %v177 = vmul.f32 %v173, %v157
    %s178 = sadd.s32 0, 0
    %s179 = smul.u32 %s178, 8
    %s180 = sadd.s32 %s179, 8
    %p181 = scmp.le.s32.totalorder %s180, 8
    // Predicated region
    $region22: #{tpu_custom_call.1} parent=1 // pred_check
      %p182 = pneg %p181
    $region23: #{tpu_custom_call.1} parent=1 // pred_check_branch
      %184 = sbr.rel (%p182) target = $region25
    $region24: #{tpu_custom_call.1} parent=1 // pred_region
      %v185 = vld [vmem:[#allocation7] sm:$0xff]
      %v186 = vld [vmem:[#allocation7 + $0x8] sm:$0xff]
      %v187 = vld [vmem:[#allocation7 + $0x10] sm:$0xff]
      %v188 = vld [vmem:[#allocation7 + $0x18] sm:$0xff]
      %v189 = vadd.f32 %v174, 0.0
      %v190 = vadd.f32 %v175, 0.0
      %v191 = vadd.f32 %v176, 0.0
      %v192 = vadd.f32 %v177, 0.0
      %v193 = vadd.f32 %v185, %v189
      %v194 = vadd.f32 %v186, %v190
      %v195 = vadd.f32 %v187, %v191
      %v196 = vadd.f32 %v188, %v192
      %197 = vst [vmem:[#allocation7] sm:$0xff] %v193
      %198 = vst [vmem:[#allocation7 + $0x8] sm:$0xff] %v194
      %199 = vst [vmem:[#allocation7 + $0x10] sm:$0xff] %v195
      %200 = vst [vmem:[#allocation7 + $0x18] sm:$0xff] %v196
    $region25: #{tpu_custom_call.1} parent=1 // pred_fallthru
      _
    %p201 = scmp.gt.s32.totalorder %s180, 8
    // Predicated region
    $region26: #{tpu_custom_call.1} parent=1 // pred_check
      %p202 = pneg %p201
    $region27: #{tpu_custom_call.1} parent=1 // pred_check_branch
      %204 = sbr.rel (%p202) target = $region29
    $region28: #{tpu_custom_call.1} parent=1 // pred_region
      %v205 = vlaneseq
      %v206 = vshrl.u32 %v205, 7
      %v207 = vstv %s179
      %v208 = vadd.s32 %v207, %v206
      %vm209 = vcmp.lt.s32.totalorder %v208, 8
      %v210 = vsel %vm209, %v174, 0.0
      %v211 = vsel %vm209, %v175, 0.0
      %v212 = vsel %vm209, %v176, 0.0
      %v213 = vsel %vm209, %v177, 0.0
      %v214 = vld [vmem:[#allocation7] sm:$0xff]
      %v215 = vld [vmem:[#allocation7 + $0x8] sm:$0xff]
      %v216 = vld [vmem:[#allocation7 + $0x10] sm:$0xff]
      %v217 = vld [vmem:[#allocation7 + $0x18] sm:$0xff]
      %v218 = vadd.f32 %v210, 0.0
      %v219 = vadd.f32 %v211, 0.0
      %v220 = vadd.f32 %v212, 0.0
      %v221 = vadd.f32 %v213, 0.0
      %v222 = vadd.f32 %v214, %v218
      %v223 = vadd.f32 %v215, %v219
      %v224 = vadd.f32 %v216, %v220
      %v225 = vadd.f32 %v217, %v221
      %226 = vst [vmem:[#allocation7] sm:$0xff] %v222
      %227 = vst [vmem:[#allocation7 + $0x8] sm:$0xff] %v223
      %228 = vst [vmem:[#allocation7 + $0x10] sm:$0xff] %v224
      %229 = vst [vmem:[#allocation7 + $0x18] sm:$0xff] %v225
    $region29: #{tpu_custom_call.1} parent=1 // pred_fallthru
      _
    // Predicated region
    $region30: #{tpu_custom_call.1} parent=1 // pred_check
      _
    $region31: #{tpu_custom_call.1} parent=1 // pred_check_branch
      %231 = sbr.rel (0) target = $region33
    $region32: #{tpu_custom_call.1} parent=1 // pred_region
      %s233 = ssub.s32 512, 512
      %234 = vsyncadd [#allocation4], %s233
      %s236 = sshll.u32 [#allocation7], 4
      %s237 = int_to_ptr.vmem [resolvable:$true] %s236
      %239 = dma.vmem_to_hbm [thread:$0]  %s237, 512, %s2, [#allocation4]
    $region33: #{tpu_custom_call.1} parent=1 // pred_fallthru
      _
    // Predicated region
    $region34: #{tpu_custom_call.1} parent=1 // pred_check
      _
    $region35: #{tpu_custom_call.1} parent=1 // pred_check_branch
      %241 = sbr.rel (0) target = $region37
    $region36: #{tpu_custom_call.1} parent=1 // pred_region
      %242 = dma.done [#allocation4], 512
    $region37: #{tpu_custom_call.1} parent=1 // pred_fallthru
      _
    %243 = vsyncpa [#allocation3], 1
    %244 = vsyncpa [#allocation6], 1
    %245 = vsyncpa [#allocation4], 1

</llo_original>
